<compile_context>
chip_gen: v5e
topology: v5e:2x2
jax: 0.10.0
libtpu: 0.0.40
codegen_flags: <defaults>
</compile_context>

<pallas_src>
import math

import jax
import jax.numpy as jnp
import numpy as np
from jax.experimental import pallas as pl
from jax.experimental.pallas import tpu as pltpu

_MIB = 1024 * 1024


def make_sinusoidal_pe(sequence_length: int, n_features: int) -> jnp.ndarray:
    """Exactly reproduces the PyTorch __init__ buffer `pe` (float32, (S, F))."""
    position = np.arange(0, sequence_length, dtype=np.float32)[:, None]       # (S, 1)
    div_term = np.exp(
        np.arange(0, n_features, 2, dtype=np.float32)
        * (-math.log(10000.0) / n_features)
    )                                                                          # (ceil(F/2),)
    pe = np.zeros((sequence_length, n_features), dtype=np.float32)
    pe[:, 0::2] = np.sin(position * div_term)
    if n_features % 2 == 1:
        pe[:, 1::2] = np.cos(position * div_term[:-1])
    else:
        pe[:, 1::2] = np.cos(position * div_term)
    return jnp.asarray(pe)


def _pe_add_kernel(x_ref, pe_ref, o_ref):
    # Broadcast add over the leading (batch) axis; lane-dense store.
    o_ref[...] = (x_ref[...] + pe_ref[...]).astype(o_ref.dtype)


# ----------------------------- tiling planner -------------------------------

def _tpu_budget():
    """(target x/out block bytes, max double-buffered VMEM footprint, vmem cap)."""
    try:
        vmem_cap = int(pltpu.get_tpu_info().vmem_capacity_bytes)
    except Exception:
        vmem_cap = 64 * _MIB
    if vmem_cap >= 96 * _MIB:          # v5e / v6e: 128 MiB physical VMEM
        return 8 * _MIB, 64 * _MIB, vmem_cap
    # v7x (64 MiB physical) or unknown: stay well under the physical ceiling.
    return 6 * _MIB, 40 * _MIB, vmem_cap


def _sublane_multiple(*itemsizes):
    # 32-bit dtypes pack 8 rows per vreg, 16-bit pack 16, 8-bit pack 32.
    return max(8, *(32 // max(1, s) for s in itemsizes))


def _largest_dividing_multiple(L, unit, cap):
    """Largest multiple of `unit` that divides L and is <= cap (assumes unit | L)."""
    cand = max(unit, min(L, (cap // unit) * unit))
    while L % cand != 0:
        cand -= unit
    return cand


def _plan_2d(B, L, xi, oi, pi):
    """Tile (B, L) with L % 128 == 0.  Returns (tb, tc, vmem_limit_bytes)."""
    target_block, budget_cap, vmem_cap = _tpu_budget()
    sub = _sublane_multiple(xi, oi)
    tb_min = B if B <= sub else sub

    # Lane tile: multiple of 128 dividing L, capped by the per-block byte target
    # and by what the VMEM budget allows at the minimum row tile.
    per_lane_elem_bytes = 2 * (tb_min * (xi + oi) + pi)            # double-buffered
    tc_budget = max(128, budget_cap // per_lane_elem_bytes)
    if B <= sub:
        # Small batch: grow the lane tile toward the block target (adaptive cap).
        tc_target = max(128, target_block // max(1, B * xi))
    else:
        tc_target = 256 * 1024          # keeps the resident pe block small (~1 MiB f32)
    tc = _largest_dividing_multiple(L, 128, min(L, tc_target, tc_budget))

    # Row tile: dtype-aligned multiple, clamped to the VMEM budget.
    if B <= sub:
        tb = B
    else:
        rows = max(sub, (target_block // max(1, tc * xi) // sub) * sub)
        tb_budget = (budget_cap // (2 * tc) - pi) // (xi + oi)
        tb_budget = max(sub, (tb_budget // sub) * sub)
        tb = min(rows, tb_budget)
        if tb >= B:
            tb = B

    # v7x megacore insurance: guarantee >= 2 grid blocks when a single large
    # block would otherwise run the whole kernel on one TensorCore.
    if (L // tc) * pl.cdiv(B, tb) == 1 and tc % 256 == 0 and tb * tc * xi >= _MIB:
        tc //= 2

    footprint = 2 * tc * (tb * (xi + oi) + pi)
    vmem_limit = min(vmem_cap, max(16 * _MIB, footprint + 4 * _MIB))
    return tb, tc, vmem_limit


def _plan_3d(B, S, F, xi, oi, pi):
    """Tile (B, S, F) with full-extent F (S*F not a 128 multiple).
    Returns (tb, ts, vmem_limit_bytes)."""
    target_block, budget_cap, vmem_cap = _tpu_budget()

    def footprint(tb, ts):
        return 2 * ts * F * (tb * (xi + oi) + pi)

    if footprint(1, S) <= budget_cap:
        ts = S
    else:
        # Tile S: largest multiple-of-8 divisor of S that fits the budget at tb=1.
        ts_cap = max(8, budget_cap // (2 * F * (xi + oi + pi)))
        ts = 0
        for cand in range((min(S, ts_cap) // 8) * 8, 0, -8):
            if S % cand == 0:
                ts = cand
                break
        if ts == 0:
            # TODO(synk): no multiple-of-8 divisor of S fits; fall back to full S
            # and simply request the larger VMEM footprint.
            ts = S

    tb = max(1, min(B, target_block // max(1, ts * F * xi)))
    tb_budget = (budget_cap // (2 * ts * F) - pi) // (xi + oi)
    tb = max(1, min(tb, tb_budget))

    vmem_limit = min(vmem_cap, max(16 * _MIB, footprint(tb, ts) + 4 * _MIB))
    return tb, ts, vmem_limit


# --------------------------------- wrapper -----------------------------------

def sinusoidal_positional_encoding(x: jnp.ndarray, pe: jnp.ndarray,
                                   *, donate_x: bool = False) -> jnp.ndarray:
    """x: (B, S, F); pe: (S, F).  Returns x + pe[None] with PyTorch promotion."""
    B, S, F = x.shape
    assert pe.shape == (S, F)
    # PyTorch semantics: the float32 pe buffer promotes half/bf16 inputs to f32.
    out_dtype = jnp.promote_types(x.dtype, pe.dtype)

    xi = jnp.dtype(x.dtype).itemsize
    oi = jnp.dtype(out_dtype).itemsize
    pi = jnp.dtype(pe.dtype).itemsize
    L = S * F

    if L % 128 == 0:
        tb, tc, vmem_limit = _plan_2d(B, L, xi, oi, pi)
        x_in = x.reshape(B, L)
        pe_in = pe.reshape(1, L)
        grid = (L // tc, pl.cdiv(B, tb))          # lane axis outermost -> pe resident
        in_specs = [
            pl.BlockSpec((tb, tc), lambda j, i: (i, j)),     # x rows
            pl.BlockSpec((1, tc), lambda j, i: (0, j)),      # shared pe
        ]
        out_specs = pl.BlockSpec((tb, tc), lambda j, i: (i, j))
        out_shape = jax.ShapeDtypeStruct((B, L), out_dtype)
    else:
        # Non-128-multiple flattened lane dim: bounded 3-D tiling, F full-extent.
        tb, ts, vmem_limit = _plan_3d(B, S, F, xi, oi, pi)
        x_in = x
        pe_in = pe.reshape(1, S, F)
        grid = (S // ts, pl.cdiv(B, tb))
        in_specs = [
            pl.BlockSpec((tb, ts, F), lambda j, i: (i, j, 0)),
            pl.BlockSpec((1, ts, F), lambda j, i: (0, j, 0)),
        ]
        out_specs = pl.BlockSpec((tb, ts, F), lambda j, i: (i, j, 0))
        out_shape = jax.ShapeDtypeStruct((B, S, F), out_dtype)

    aliases = {}
    if donate_x and x.dtype == out_dtype:
        aliases = {0: 0}   # write the result in place of x (caller must not reuse x)

    out = pl.pallas_call(
        _pe_add_kernel,
        out_shape=out_shape,
        grid_spec=pltpu.PrefetchScalarGridSpec(
            num_scalar_prefetch=0,
            grid=grid,
            in_specs=in_specs,
            out_specs=out_specs,
        ),
        compiler_params=pltpu.CompilerParams(
            dimension_semantics=("parallel", "parallel"),
            vmem_limit_bytes=int(vmem_limit),
        ),
        input_output_aliases=aliases,
    )(x_in, pe_in)
    return out.reshape(B, S, F)


if __name__ == "__main__":
    key = jax.random.PRNGKey(0)

    # Primary demo shape (matches the module's intended use).
    batch, seq_len, n_features = 2, 8, 32
    x = jax.random.normal(key, (batch, seq_len, n_features), dtype=jnp.float32)
    pe = make_sinusoidal_pe(seq_len, n_features)
    out = jax.block_until_ready(sinusoidal_positional_encoding(x, pe))
    ref = x + pe[None, :, :]
    np.testing.assert_allclose(np.asarray(out), np.asarray(ref), rtol=1e-6, atol=1e-6)

    # Row-tiling path (B > 8), 3-D fallback path (odd F / non-128-multiple S*F),
    # and bf16 promotion path.
    extra_cases = [
        ((16, 16, 64), jnp.float32),
        ((3, 8, 33), jnp.float32),
        ((16, 16, 64), jnp.bfloat16),
    ]
    for (b2, s2, f2), dt in extra_cases:
        k2 = jax.random.fold_in(key, b2 * 10000 + f2 * 10 + jnp.dtype(dt).itemsize)
        x2 = jax.random.normal(k2, (b2, s2, f2), dtype=dt)
        pe2 = make_sinusoidal_pe(s2, f2)
        out2 = jax.block_until_ready(sinusoidal_positional_encoding(x2, pe2))
        ref2 = x2 + pe2[None, :, :]      # jnp promotion matches PyTorch (f32 buffer)
        assert out2.dtype == ref2.dtype
        np.testing.assert_allclose(np.asarray(out2), np.asarray(ref2),
                                   rtol=1e-6, atol=1e-6)

    print("KERNEL_OK")
</pallas_src>

<mosaic_0001>
module attributes {stable_mosaic.version = 11 : i64} {
  func.func @_pe_add_kernel(%arg0: i32, %arg1: i32, %arg2: memref<2x256xf32, #tpu.memory_space<vmem>>, %arg3: memref<1x256xf32, #tpu.memory_space<vmem>>, %arg4: memref<2x256xf32, #tpu.memory_space<vmem>>) attributes {dimension_semantics = [#tpu.dimension_semantics<parallel>, #tpu.dimension_semantics<parallel>], iteration_bounds = array<i64: 1, 1>, scalar_prefetch = 0 : i64, scratch_operands = 0 : i64, tpu.core_type = #tpu.core_type<tc>, window_params = [{transform_indices = @transform_0, window_bounds = array<i64: 2, 256>}, {transform_indices = @transform_1, window_bounds = array<i64: 1, 256>}, {transform_indices = @transform_2, window_bounds = array<i64: 2, 256>}]} {
    %c0 = arith.constant 0 : index
    %c0_0 = arith.constant 0 : index
    %0 = vector.load %arg2[%c0, %c0_0] : memref<2x256xf32, #tpu.memory_space<vmem>>, vector<2x256xf32>
    %c0_1 = arith.constant 0 : index
    %c0_2 = arith.constant 0 : index
    %1 = vector.load %arg3[%c0_1, %c0_2] : memref<1x256xf32, #tpu.memory_space<vmem>>, vector<1x256xf32>
    %2 = vector.broadcast %1 : vector<1x256xf32> to vector<2x256xf32>
    %3 = arith.addf %0, %2 : vector<2x256xf32>
    %c0_3 = arith.constant 0 : index
    %c0_4 = arith.constant 0 : index
    %4 = vector.load %arg4[%c0_3, %c0_4] : memref<2x256xf32, #tpu.memory_space<vmem>>, vector<2x256xf32>
    tpu.vector_store %arg4[%c0_3, %c0_4], %3 {strides = array<i32>} : memref<2x256xf32, #tpu.memory_space<vmem>>, vector<2x256xf32>,
    return
  }
  func.func @transform_0(%arg0: i32, %arg1: i32) -> (i32, i32) {
    %c0_i32 = arith.constant 0 : i32
    return %arg1, %arg0 : i32, i32
  }
  func.func @transform_1(%arg0: i32, %arg1: i32) -> (i32, i32) {
    %c0_i32 = arith.constant 0 : i32
    %c0_i32_0 = arith.constant 0 : i32
    return %c0_i32, %arg0 : i32, i32
  }
  func.func @transform_2(%arg0: i32, %arg1: i32) -> (i32, i32) {
    %c0_i32 = arith.constant 0 : i32
    return %arg1, %arg0 : i32, i32
  }
}

</mosaic_0001>

<llo_original>
// kernel: tpu_custom_call.1
$region0: #{tpu_custom_call.1}
  #allocation0 [shape = 'u32[]', space=smem, size = 0x4, offset = 0x4, fixed_abs, tag = 'smem constant byte address 0x4 - core index']
  #allocation1 [shape = 'u32[72,128]{1,0:T(1,128)}', space=vmem, size = 0x9000, scoped, tag = 'internal scratch']
  %s0 = inlined_call_operand.hbm [shape: f32[2,256], index: 0, kind: input, shape index: {}]
  %s1 = inlined_call_operand.hbm [shape: f32[1,256], index: 1, kind: input, shape index: {}]
  %s2 = inlined_call_operand.hbm [shape: f32[2,256], index: 2, kind: output, shape index: {}]
  %s3 = sld [smem:[#allocation0]]
  $region26: #{tpu_custom_call.1} parent=0
    _
  %s5 = ssub.s32 1, %s3
  %s6 = scalar_select 0, %s5, %s3
  $region1: #{tpu_custom_call.1} parent=0
    #allocation2 [shape = 'u8[2048]{0}', space=vmem, size = 0x800, scoped, tag = 'input window, operand 0, single buffered']
    #allocation3 [shape = 's32[1]{0}', space=sflag, size = 0x4, scoped, tag = 'scoped memory for tpu_custom_call.1']
    #allocation4 [shape = 's32[1]{0}', space=sflag, size = 0x4, scoped, tag = 'scoped memory for tpu_custom_call.1']
    #allocation5 [shape = 'u8[1024]{0}', space=vmem, size = 0x400, scoped, tag = 'input window, operand 1, single buffered']
    #allocation6 [shape = 's32[1]{0}', space=sflag, size = 0x4, scoped, tag = 'scoped memory for tpu_custom_call.1']
    #allocation7 [shape = 'u8[2048]{0}', space=vmem, size = 0x800, scoped, tag = 'output window, operand 0, single buffered']
    %7 = vsyncpa [#allocation3], 0
    %8 = vsyncpa [#allocation6], 0
    %9 = vsyncpa [#allocation4], 0
    // Predicated region
    $region2: #{tpu_custom_call.1} parent=1 // pred_check
      _
    $region3: #{tpu_custom_call.1} parent=1 // pred_check_branch
      %11 = sbr.rel (0) target = $region5
    $region4: #{tpu_custom_call.1} parent=1 // pred_region
      %13 = vsyncadd [#allocation3], 0
      %s15 = sshll.u32 %s0, 4
      %s16 = int_to_ptr.hbm [resolvable:$true] %s15
      %s17 = sshll.u32 [#allocation2], 4
      %s18 = int_to_ptr.vmem [resolvable:$true] %s17
      %20 = dma.hbm_to_vmem [thread:$0]  %s16, 64, %s18, [#allocation3]
    $region5: #{tpu_custom_call.1} parent=1 // pred_fallthru
      _
    // Predicated region
    $region6: #{tpu_custom_call.1} parent=1 // pred_check
      _
    $region7: #{tpu_custom_call.1} parent=1 // pred_check_branch
      %22 = sbr.rel (0) target = $region9
    $region8: #{tpu_custom_call.1} parent=1 // pred_region
      %24 = vsyncadd [#allocation6], 0
      %s26 = sshll.u32 %s1, 4
      %s27 = int_to_ptr.hbm [resolvable:$true] %s26
      %s28 = sshll.u32 [#allocation5], 4
      %s29 = int_to_ptr.vmem [resolvable:$true] %s28
      %31 = dma.hbm_to_vmem [thread:$0]  %s27, 32, %s29, [#allocation6]
    $region9: #{tpu_custom_call.1} parent=1 // pred_fallthru
      _
    // Predicated region
    $region10: #{tpu_custom_call.1} parent=1 // pred_check
      _
    $region11: #{tpu_custom_call.1} parent=1 // pred_check_branch
      %33 = sbr.rel (0) target = $region13
    $region12: #{tpu_custom_call.1} parent=1 // pred_region
      %35 = dma.done [#allocation3], 64
    $region13: #{tpu_custom_call.1} parent=1 // pred_fallthru
      _
    // Predicated region
    $region14: #{tpu_custom_call.1} parent=1 // pred_check
      _
    $region15: #{tpu_custom_call.1} parent=1 // pred_check_branch
      %37 = sbr.rel (0) target = $region17
    $region16: #{tpu_custom_call.1} parent=1 // pred_region
      %39 = dma.done [#allocation6], 32
    $region17: #{tpu_custom_call.1} parent=1 // pred_fallthru
      _
    %v40 = vld [vmem:[#allocation2] sm:$0xf]
    %v41 = vld [vmem:[#allocation5] sm:$0x3]
    %v43 = vperm.slane %v41, 0
    %v44 = vperm.slane %v41, 1
    %v45 = vrot.slane %v44, 6
    %vm46 = vcmask 1041408
    %v47 = vsel %vm46, %v43, %v45
    %v49 = vadd.f32 %v40, %v47
    %50 = vst [vmem:[#allocation7] sm:$0xf] %v49
    // Predicated region
    $region18: #{tpu_custom_call.1} parent=1 // pred_check
      _
    $region19: #{tpu_custom_call.1} parent=1 // pred_check_branch
      %52 = sbr.rel (0) target = $region21
    $region20: #{tpu_custom_call.1} parent=1 // pred_region
      %54 = vsyncadd [#allocation4], 0
      %s56 = sshll.u32 [#allocation7], 4
      %s57 = int_to_ptr.vmem [resolvable:$true] %s56
      %s58 = sshll.u32 %s2, 4
      %s59 = int_to_ptr.hbm [resolvable:$true] %s58
      %61 = dma.vmem_to_hbm [thread:$0]  %s57, 64, %s59, [#allocation4]
    $region21: #{tpu_custom_call.1} parent=1 // pred_fallthru
      _
    // Predicated region
    $region22: #{tpu_custom_call.1} parent=1 // pred_check
      _
    $region23: #{tpu_custom_call.1} parent=1 // pred_check_branch
      %63 = sbr.rel (0) target = $region25
    $region24: #{tpu_custom_call.1} parent=1 // pred_region
      %65 = dma.done [#allocation4], 64
    $region25: #{tpu_custom_call.1} parent=1 // pred_fallthru
      _
    %66 = vsyncpa [#allocation3], 1
    %67 = vsyncpa [#allocation6], 1
    %68 = vsyncpa [#allocation4], 1

</llo_original>
